<compile_context>
chip_gen: v6e
topology: v6e:2x2x1
jax: 0.10.0
libtpu: 0.0.40
codegen_flags: <defaults>
</compile_context>

<pallas_src>
import math

import jax
import jax.numpy as jnp
from jax.experimental import pallas as pl
from jax.experimental.pallas import tpu as pltpu

LANE = 128


def _round_up(x, n):
    return ((x + n - 1) // n) * n


def _vmem_capacity_bytes():
    try:
        return int(pltpu.get_tpu_info().vmem_capacity_bytes)
    except Exception:
        return 64 * 1024 * 1024  # conservative default (v7x per-TensorCore)


def _choose_tm(m, rows_budget, sub, big_align=256):
    """Pick the M-tile size.

    Guarantees >= 2 grid steps (v7x megacore + DMA/compute overlap) whenever m
    is larger than one sublane group, prefers an even number of steps, and
    aligns large tiles to 256 rows (also a multiple of 128, so v5e's 4x128
    MXU M-passes stay full) or small ones to the dtype sublane granularity.
    """
    if m <= sub:
        return m                        # single full-extent block (legal)
    rows_budget = max(sub, int(rows_budget))
    n_steps = max(2, pl.cdiv(m, rows_budget))
    if n_steps % 2:
        n_steps += 1                    # even split across the two TCs
    tm = pl.cdiv(m, n_steps)
    align = big_align if tm >= big_align else sub
    tm = max(sub, (tm // align) * align)   # round DOWN: stays within budget
    return min(tm, m)


def _lora_kernel(x_ref, wd_ref, wu_ref, o_ref):
    # (TM, in_pad) @ (in_pad, rank) -> (TM, rank); f32 accumulation on the MXU.
    h = jnp.dot(x_ref[...], wd_ref[...], preferred_element_type=jnp.float32)
    # (alpha / rank) is already folded into wu_t in the wrapper.
    y = jnp.dot(h.astype(wu_ref.dtype), wu_ref[...],
                preferred_element_type=jnp.float32)
    o_ref[...] = y.astype(o_ref.dtype)


def lora_forward(x, w_down, w_up, *, alpha=1.0, block_m=None,
                 compute_dtype=jnp.bfloat16,
                 vmem_budget_bytes=None, vmem_limit_bytes=None):
    """LoRA forward: y = (x @ w_down.T @ w_up.T) * (alpha / rank).

    x:      (..., in_dim)
    w_down: (rank, in_dim)   -- PyTorch lora_down.weight layout
    w_up:   (out_dim, rank)  -- PyTorch lora_up.weight layout
    """
    rank, in_dim = w_down.shape
    out_dim, rank_u = w_up.shape
    assert rank_u == rank, "w_up must be (out_dim, rank)"
    assert x.shape[-1] == in_dim
    scale = alpha / rank

    out_dtype = x.dtype
    lead = x.shape[:-1]
    m = math.prod(lead) if lead else 1

    # ---- generation-aware VMEM budget / limit -----------------------------
    cap = _vmem_capacity_bytes()               # 64 MiB v7x, 128 MiB v5e/v6e
    if vmem_budget_bytes is None:
        vmem_budget_bytes = int(0.65 * cap)    # ~42 MiB v7x, ~83 MiB v5e/v6e
    limit_cap = int(0.85 * cap)                # ~54 MiB v7x, ~109 MiB v5e/v6e

    # ---- lane-dense padding of the feature dims ---------------------------
    in_pad = _round_up(in_dim, LANE)
    out_pad = _round_up(out_dim, LANE)

    x2 = x.reshape(m, in_dim)
    if in_pad != in_dim:
        x2 = jnp.pad(x2, ((0, 0), (0, in_pad - in_dim)))

    # One-time weight transforms (tiny): transpose + fold scale in f32, then
    # pad & cast.  The kernel body then has no per-step transposes or scales.
    wd_t = w_down.astype(jnp.float32).T                      # (in_dim, rank)
    wu_t = w_up.astype(jnp.float32).T * jnp.float32(scale)   # (rank, out_dim)
    if in_pad != in_dim:
        wd_t = jnp.pad(wd_t, ((0, in_pad - in_dim), (0, 0)))
    if out_pad != out_dim:
        wu_t = jnp.pad(wu_t, ((0, 0), (0, out_pad - out_dim)))

    x2 = x2.astype(compute_dtype)
    wd_t = wd_t.astype(compute_dtype)
    wu_t = wu_t.astype(compute_dtype)

    io_size = jnp.dtype(compute_dtype).itemsize
    out_size = jnp.dtype(out_dtype).itemsize
    sub = max(8, 32 // io_size)        # sublane pack: 8 f32, 16 bf16, 32 int8

    # Actual VMEM footprint of the resident weights (lane/sublane padded).
    w_vmem = (in_pad * LANE + max(rank, sub) * out_pad) * io_size

    # ---- choose the M tile -------------------------------------------------
    per_row = 2 * in_pad * io_size + 2 * out_pad * out_size  # dbl-buffered tiles
    if block_m is None:
        avail = vmem_budget_bytes - 2 * w_vmem   # conservative: 2x weights
        if avail < per_row * sub:
            # TODO(synk): add a second grid axis tiling out_dim for very large
            # in/out dims instead of failing.
            raise ValueError("LoRA weights + minimal row tiles exceed the "
                             "VMEM budget; out_dim tiling not implemented.")
        tm = _choose_tm(m, avail // per_row, sub)
    else:
        tm = min(int(block_m), m)
    grid_m = pl.cdiv(m, tm)

    need = tm * per_row + 2 * w_vmem + tm * (out_pad + LANE) * 4  # + f32 temps
    if vmem_limit_bytes is None:
        vmem_limit_bytes = int(min(limit_cap,
                                   max(32 * 1024 * 1024,
                                       int(1.25 * need) + (4 << 20))))

    cost = pl.CostEstimate(
        flops=int(2 * m * rank * (in_pad + out_pad)),
        transcendentals=0,
        bytes_accessed=int(m * (in_pad * io_size + out_pad * out_size)
                           + (in_pad + out_pad) * rank * io_size),
    )

    def _run(single_buffer_weights):
        wkw = ({"pipeline_mode": pl.Buffered(1)}
               if single_buffer_weights else {})
        call = pl.pallas_call(
            _lora_kernel,
            out_shape=jax.ShapeDtypeStruct((m, out_pad), out_dtype),
            grid_spec=pltpu.PrefetchScalarGridSpec(
                num_scalar_prefetch=0,
                grid=(grid_m,),
                in_specs=[
                    pl.BlockSpec((tm, in_pad), lambda i: (i, 0)),            # x rows
                    pl.BlockSpec((in_pad, rank), lambda i: (0, 0), **wkw),   # resident
                    pl.BlockSpec((rank, out_pad), lambda i: (0, 0), **wkw),  # resident
                ],
                out_specs=pl.BlockSpec((tm, out_pad), lambda i: (i, 0)),
            ),
            compiler_params=pltpu.CompilerParams(
                dimension_semantics=("parallel",),  # shard row tiles across TCs
                vmem_limit_bytes=vmem_limit_bytes,
            ),
            cost_estimate=cost,
        )
        return jax.block_until_ready(call(x2, wd_t, wu_t))

    try:
        out = _run(True)           # single-buffered resident weights
    except Exception:
        out = _run(False)          # fall back to default double buffering

    if out_pad != out_dim:
        out = out[:, :out_dim]
    return out.reshape(*lead, out_dim)


def init_lora_params(key, in_dim, out_dim, rank):
    """Deterministic init matching the PyTorch module's __init__."""
    # kaiming_uniform_(a=sqrt(5)) on weight (rank, in_dim):
    # bound = 1/sqrt(fan_in), fan_in = in_dim
    bound = 1.0 / math.sqrt(in_dim)
    w_down = jax.random.uniform(
        key, (rank, in_dim), minval=-bound, maxval=bound, dtype=jnp.float32)
    w_up = jnp.zeros((out_dim, rank), dtype=jnp.float32)  # nn.init.zeros_
    return w_down, w_up


def _reference(x, w_down, w_up, alpha, rank):
    scale = alpha / rank
    return (x @ w_down.T @ w_up.T) * scale


if __name__ == "__main__":
    key = jax.random.PRNGKey(0)
    k_x, k_w, k_u, k_x2, k_w2, k_u2 = jax.random.split(key, 6)

    # Small shapes consistent with the module; m = 2*72 = 144 rows.
    batch, seq, in_dim, out_dim, rank, alpha = 2, 72, 128, 128, 4, 1.0
    x = jax.random.normal(k_x, (batch, seq, in_dim), dtype=jnp.float32)
    w_down, w_up = init_lora_params(k_w, in_dim, out_dim, rank)

    # 1) Faithful-to-__init__ run: lora_up is zeros -> output must be zeros.
    y = jax.block_until_ready(lora_forward(x, w_down, w_up, alpha=alpha))
    assert jnp.allclose(y, jnp.zeros_like(y)), "mismatch (zero-init up)"

    # 2) Fine-tuned up weights, f32 compute path: tight tolerance vs reference.
    w_up_ft = jax.random.normal(k_u, (out_dim, rank), dtype=jnp.float32) * 0.05
    y_ref = _reference(x, w_down, w_up_ft, alpha, rank)
    y2 = jax.block_until_ready(
        lora_forward(x, w_down, w_up_ft, alpha=alpha,
                     compute_dtype=jnp.float32))
    assert jnp.allclose(y2, y_ref, atol=1e-4, rtol=1e-4), "mismatch (f32 path)"

    # 3) Default bf16 I/O production path, auto tile (grid_m >= 2 enforced).
    y3 = jax.block_until_ready(lora_forward(x, w_down, w_up_ft, alpha=alpha))
    assert jnp.allclose(y3, y_ref, atol=3e-2, rtol=5e-2), "mismatch (bf16 path)"

    # 4) Explicit small tile -> multi-block grid with a tail tile (64,64,16).
    y4 = jax.block_until_ready(
        lora_forward(x, w_down, w_up_ft, alpha=alpha, block_m=64))
    assert jnp.allclose(y4, y_ref, atol=3e-2, rtol=5e-2), "mismatch (tiled M)"

    # 5) Non-128-multiple feature dims exercise the lane-padding path.
    in2, out2 = 96, 200
    x_b = jax.random.normal(k_x2, (batch, seq, in2), dtype=jnp.float32)
    wd_b, _ = init_lora_params(k_w2, in2, out2, rank)
    wu_b = jax.random.normal(k_u2, (out2, rank), dtype=jnp.float32) * 0.05
    yb_ref = _reference(x_b, wd_b, wu_b, alpha, rank)
    yb = jax.block_until_ready(
        lora_forward(x_b, wd_b, wu_b, alpha=alpha,
                     compute_dtype=jnp.float32))
    assert yb.shape == (batch, seq, out2)
    assert jnp.allclose(yb, yb_ref, atol=1e-4, rtol=1e-4), "mismatch (padded dims)"

    print("KERNEL_OK")
</pallas_src>

<mosaic_0001>
module attributes {stable_mosaic.version = 11 : i64} {
  func.func @_lora_kernel(%arg0: i32, %arg1: memref<64x128xbf16, #tpu.memory_space<vmem>>, %arg2: memref<128x4xbf16, #tpu.memory_space<vmem>>, %arg3: memref<4x128xbf16, #tpu.memory_space<vmem>>, %arg4: memref<64x128xf32, #tpu.memory_space<vmem>>) attributes {dimension_semantics = [#tpu.dimension_semantics<parallel>], iteration_bounds = array<i64: 3>, scalar_prefetch = 0 : i64, scratch_operands = 0 : i64, tpu.core_type = #tpu.core_type<tc>, window_params = [{transform_indices = @transform_0, window_bounds = array<i64: 64, 128>}, {pipeline_mode = #tpu.pipeline_mode<synchronous>, transform_indices = @transform_1, window_bounds = array<i64: 128, 4>}, {pipeline_mode = #tpu.pipeline_mode<synchronous>, transform_indices = @transform_2, window_bounds = array<i64: 4, 128>}, {transform_indices = @transform_3, window_bounds = array<i64: 64, 128>}]} {
    %c0 = arith.constant 0 : index
    %c0_0 = arith.constant 0 : index
    %0 = vector.load %arg1[%c0, %c0_0] : memref<64x128xbf16, #tpu.memory_space<vmem>>, vector<64x128xbf16>
    %c0_1 = arith.constant 0 : index
    %c0_2 = arith.constant 0 : index
    %1 = vector.load %arg2[%c0_1, %c0_2] : memref<128x4xbf16, #tpu.memory_space<vmem>>, vector<128x4xbf16>
    %cst = arith.constant dense<0.000000e+00> : vector<64x4xf32>
    %2 = tpu.matmul %0, %1, %cst {dimension_numbers = #tpu.dot_dimension_numbers<[1], [0], [0], [1], [0, 0, 1, 1], [], []>} : vector<64x128xbf16>, vector<128x4xbf16>, vector<64x4xf32> -> vector<64x4xf32>
    %3 = arith.truncf %2 : vector<64x4xf32> to vector<64x4xbf16>
    %c0_3 = arith.constant 0 : index
    %c0_4 = arith.constant 0 : index
    %4 = vector.load %arg3[%c0_3, %c0_4] : memref<4x128xbf16, #tpu.memory_space<vmem>>, vector<4x128xbf16>
    %cst_5 = arith.constant dense<0.000000e+00> : vector<64x128xf32>
    %5 = tpu.matmul %3, %4, %cst_5 {dimension_numbers = #tpu.dot_dimension_numbers<[1], [0], [0], [1], [0, 0, 1, 1], [], []>} : vector<64x4xbf16>, vector<4x128xbf16>, vector<64x128xf32> -> vector<64x128xf32>
    %c0_6 = arith.constant 0 : index
    %c0_7 = arith.constant 0 : index
    %6 = vector.load %arg4[%c0_6, %c0_7] : memref<64x128xf32, #tpu.memory_space<vmem>>, vector<64x128xf32>
    tpu.vector_store %arg4[%c0_6, %c0_7], %5 {strides = array<i32>} : memref<64x128xf32, #tpu.memory_space<vmem>>, vector<64x128xf32>,
    return
  }
  func.func @transform_0(%arg0: i32) -> (i32, i32) {
    %c0_i32 = arith.constant 0 : i32
    %c0_i32_0 = arith.constant 0 : i32
    return %arg0, %c0_i32 : i32, i32
  }
  func.func @transform_1(%arg0: i32) -> (i32, i32) {
    %c0_i32 = arith.constant 0 : i32
    %c0_i32_0 = arith.constant 0 : i32
    %c0_i32_1 = arith.constant 0 : i32
    return %c0_i32, %c0_i32_0 : i32, i32
  }
  func.func @transform_2(%arg0: i32) -> (i32, i32) {
    %c0_i32 = arith.constant 0 : i32
    %c0_i32_0 = arith.constant 0 : i32
    %c0_i32_1 = arith.constant 0 : i32
    return %c0_i32, %c0_i32_0 : i32, i32
  }
  func.func @transform_3(%arg0: i32) -> (i32, i32) {
    %c0_i32 = arith.constant 0 : i32
    %c0_i32_0 = arith.constant 0 : i32
    return %arg0, %c0_i32 : i32, i32
  }
}

module attributes {stable_mosaic.version = 11 : i64} {
  func.func @_lora_kernel(%arg0: i32, %arg1: memref<64x128xbf16, #tpu.memory_space<vmem>>, %arg2: memref<128x4xbf16, #tpu.memory_space<vmem>>, %arg3: memref<4x128xbf16, #tpu.memory_space<vmem>>, %arg4: memref<64x128xf32, #tpu.memory_space<vmem>>) attributes {dimension_semantics = [#tpu.dimension_semantics<parallel>], iteration_bounds = array<i64: 3>, scalar_prefetch = 0 : i64, scratch_operands = 0 : i64, tpu.core_type = #tpu.core_type<tc>, window_params = [{transform_indices = @transform_0, window_bounds = array<i64: 64, 128>}, {pipeline_mode = #tpu.pipeline_mode<synchronous>, transform_indices = @transform_1, window_bounds = array<i64: 128, 4>}, {pipeline_mode = #tpu.pipeline_mode<synchronous>, transform_indices = @transform_2, window_bounds = array<i64: 4, 128>}, {transform_indices = @transform_3, window_bounds = array<i64: 64, 128>}]} {
    %c0 = arith.constant 0 : index
    %c0_0 = arith.constant 0 : index
    %0 = vector.load %arg1[%c0, %c0_0] : memref<64x128xbf16, #tpu.memory_space<vmem>>, vector<64x128xbf16>
    %c0_1 = arith.constant 0 : index
    %c0_2 = arith.constant 0 : index
    %1 = vector.load %arg2[%c0_1, %c0_2] : memref<128x4xbf16, #tpu.memory_space<vmem>>, vector<128x4xbf16>
    %cst = arith.constant dense<0.000000e+00> : vector<64x4xf32>
    %2 = tpu.matmul %0, %1, %cst {dimension_numbers = #tpu.dot_dimension_numbers<[1], [0], [0], [1], [0, 0, 1, 1], [], []>} : vector<64x128xbf16>, vector<128x4xbf16>, vector<64x4xf32> -> vector<64x4xf32>
    %3 = arith.truncf %2 : vector<64x4xf32> to vector<64x4xbf16>
    %c0_3 = arith.constant 0 : index
    %c0_4 = arith.constant 0 : index
    %4 = vector.load %arg3[%c0_3, %c0_4] : memref<4x128xbf16, #tpu.memory_space<vmem>>, vector<4x128xbf16>
    %cst_5 = arith.constant dense<0.000000e+00> : vector<64x128xf32>
    %5 = tpu.matmul %3, %4, %cst_5 {dimension_numbers = #tpu.dot_dimension_numbers<[1], [0], [0], [1], [0, 0, 1, 1], [], []>} : vector<64x4xbf16>, vector<4x128xbf16>, vector<64x128xf32> -> vector<64x128xf32>
    %c0_6 = arith.constant 0 : index
    %c0_7 = arith.constant 0 : index
    %6 = vector.load %arg4[%c0_6, %c0_7] : memref<64x128xf32, #tpu.memory_space<vmem>>, vector<64x128xf32>
    tpu.vector_store %arg4[%c0_6, %c0_7], %5 {strides = array<i32>} : memref<64x128xf32, #tpu.memory_space<vmem>>, vector<64x128xf32>,
    return
  }
  func.func @transform_0(%arg0: i32) -> (i32, i32) {
    %c0_i32 = arith.constant 0 : i32
    %c0_i32_0 = arith.constant 0 : i32
    return %arg0, %c0_i32 : i32, i32
  }
  func.func @transform_1(%arg0: i32) -> (i32, i32) {
    %c0_i32 = arith.constant 0 : i32
    %c0_i32_0 = arith.constant 0 : i32
    %c0_i32_1 = arith.constant 0 : i32
    return %c0_i32, %c0_i32_0 : i32, i32
  }
  func.func @transform_2(%arg0: i32) -> (i32, i32) {
    %c0_i32 = arith.constant 0 : i32
    %c0_i32_0 = arith.constant 0 : i32
    %c0_i32_1 = arith.constant 0 : i32
    return %c0_i32, %c0_i32_0 : i32, i32
  }
  func.func @transform_3(%arg0: i32) -> (i32, i32) {
    %c0_i32 = arith.constant 0 : i32
    %c0_i32_0 = arith.constant 0 : i32
    return %arg0, %c0_i32 : i32, i32
  }
}

</mosaic_0001>

<llo_original>
// kernel: tpu_custom_call.1
$region0: #{tpu_custom_call.1}
  #allocation0 [shape = 'u32[]', space=smem, size = 0x4, offset = 0x4, fixed_abs, tag = 'smem constant byte address 0x4 - core index']
  #allocation1 [shape = 'u32[144,128]{1,0:T(1,128)}', space=vmem, size = 0x12000, scoped, tag = 'internal scratch']
  %s0 = inlined_call_operand.hbm [shape: bf16[144,128], index: 0, kind: input, shape index: {}]
  %s1 = inlined_call_operand.vmem [shape: bf16[128,4], index: 1, kind: input, shape index: {}]
  %s2 = inlined_call_operand.vmem [shape: bf16[4,128], index: 2, kind: input, shape index: {}]
  %s3 = inlined_call_operand.hbm [shape: f32[144,128], index: 3, kind: output, shape index: {}]
  %s4 = sld [smem:[#allocation0]]
  $region49: #{tpu_custom_call.1} parent=0
    _
  %s6 = ssub.s32 1, %s4
  %s7 = scalar_select 0, %s6, %s4
  $region1: #{tpu_custom_call.1} parent=0
    #allocation2 [shape = 'u8[32768]{0}', space=vmem, size = 0x8000, scoped, tag = 'input window, operand 0']
    #allocation3 [shape = 's32[2]{0}', space=sflag, size = 0x8, scoped, tag = 'scoped memory for tpu_custom_call.1']
    #allocation4 [shape = 's32[2]{0}', space=sflag, size = 0x8, scoped, tag = 'scoped memory for tpu_custom_call.1']
    #allocation5 [shape = 'u8[65536]{0}', space=vmem, size = 0x10000, scoped, tag = 'output window, operand 0']
    %8 = vsyncpa [#allocation3], 0
    %s9 = scalar_lea.sflag [#allocation3], 1
    %10 = vsyncpa %s9, 0
    %11 = vsyncpa [#allocation4], 0
    %s12 = scalar_lea.sflag [#allocation4], 1
    %13 = vsyncpa %s12, 0
    loop: start=0, step=1, limit=5
    $region2: #{tpu_custom_call.1} parent=1 // loop_pre_header
      _
    $region3: #{tpu_custom_call.1} parent=1 // loop_header
      %s15 = sphi 0, %s19
      %p16 = scmp.ge.s32.totalorder %s15, 5
      %s25 = sphi 0, %s27
      %s28 = sphi 0, %s25
      %s29 = sphi 0, %s28
      %s45 = sphi 0, %s29
      %s49 = sphi 0, %s49
      %s51 = sphi 0, %s49
      %s52 = sphi 0, %s51
      %s66 = sphi 0, %s52
      %s70 = sphi 0, %s70
      %s72 = sphi 0, %s70
      %s73 = sphi 0, %s72
      %s87 = sphi 0, %s73
      %s93 = sphi 0, %s95
      %s96 = sphi 0, %s93
      %s97 = sphi 0, %s96
      %s113 = sphi 0, %s97
    $region4: #{tpu_custom_call.1} parent=1 // loop_header_branch
      %18 = sbr.rel (%p16) target = $region8
    $region5: #{tpu_custom_call.1} parent=1 // loop_body
      %s20 = ssub.s32 %s15, 1
      %s21 = ssub.s32 %s15, 2
      %s22 = sadd.s32 %s15, 1
      %s23 = ssub.s32 %s15, %s22
      %p24 = scmp.eq.s32.totalorder %s23, 0
      %s26 = sadd.s32 %s25, 1
      %s27 = scalar_select %p24, %s25, %s26
      %p30 = pneg %p24
      %p31 = scmp.eq.s32.totalorder %s15, 2
      %p32 = por %p30, %p31
      %p33 = scmp.ne.s32.totalorder %s25, %s28
      %p34 = scmp.eq.s32.totalorder %s15, 0
      %p35 = por %p33, %p34
      %p36 = scmp.ne.s32.totalorder %s25, %s28
      %p37 = scmp.eq.s32.totalorder %s20, 2
      %p38 = por %p36, %p37
      %p39 = scmp.ne.s32.totalorder %s28, %s29
      %p40 = scmp.eq.s32.totalorder %s20, 0
      %p41 = por %p39, %p40
      %p42 = scmp.ne.s32.totalorder %s28, %s29
      %p43 = scmp.eq.s32.totalorder %s21, 2
      %p44 = por %p42, %p43
      %p46 = scmp.ne.s32.totalorder %s29, %s45
      %p47 = scmp.eq.s32.totalorder %s21, 0
      %p48 = por %p46, %p47
      %s50 = sadd.s32 %s49, 1
      %p53 = scmp.eq.s32.totalorder %s15, 2
      %p54 = scmp.ne.s32.totalorder %s49, %s51
      %p55 = scmp.eq.s32.totalorder %s15, 0
      %p56 = por %p54, %p55
      %p57 = scmp.ne.s32.totalorder %s49, %s51
      %p58 = scmp.eq.s32.totalorder %s20, 2
      %p59 = por %p57, %p58
      %p60 = scmp.ne.s32.totalorder %s51, %s52
      %p61 = scmp.eq.s32.totalorder %s20, 0
      %p62 = por %p60, %p61
      %p63 = scmp.ne.s32.totalorder %s51, %s52
      %p64 = scmp.eq.s32.totalorder %s21, 2
      %p65 = por %p63, %p64
      %p67 = scmp.ne.s32.totalorder %s52, %s66
      %p68 = scmp.eq.s32.totalorder %s21, 0
      %p69 = por %p67, %p68
      %s71 = sadd.s32 %s70, 1
      %p74 = scmp.eq.s32.totalorder %s15, 2
      %p75 = scmp.ne.s32.totalorder %s70, %s72
      %p76 = scmp.eq.s32.totalorder %s15, 0
      %p77 = por %p75, %p76
      %p78 = scmp.ne.s32.totalorder %s70, %s72
      %p79 = scmp.eq.s32.totalorder %s20, 2
      %p80 = por %p78, %p79
      %p81 = scmp.ne.s32.totalorder %s72, %s73
      %p82 = scmp.eq.s32.totalorder %s20, 0
      %p83 = por %p81, %p82
      %p84 = scmp.ne.s32.totalorder %s72, %s73
      %p85 = scmp.eq.s32.totalorder %s21, 2
      %p86 = por %p84, %p85
      %p88 = scmp.ne.s32.totalorder %s73, %s87
      %p89 = scmp.eq.s32.totalorder %s21, 0
      %p90 = por %p88, %p89
      %s91 = ssub.s32 %s15, %s22
      %p92 = scmp.eq.s32.totalorder %s91, 0
      %s94 = sadd.s32 %s93, 1
      %s95 = scalar_select %p92, %s93, %s94
      %p98 = pneg %p92
      %p99 = scmp.eq.s32.totalorder %s15, 2
      %p100 = por %p98, %p99
      %p101 = scmp.ne.s32.totalorder %s93, %s96
      %p102 = scmp.eq.s32.totalorder %s15, 0
      %p103 = por %p101, %p102
      %p104 = scmp.ne.s32.totalorder %s93, %s96
      %p105 = scmp.eq.s32.totalorder %s20, 2
      %p106 = por %p104, %p105
      %p107 = scmp.ne.s32.totalorder %s96, %s97
      %p108 = scmp.eq.s32.totalorder %s20, 0
      %p109 = por %p107, %p108
      %p110 = scmp.ne.s32.totalorder %s96, %s97
      %p111 = scmp.eq.s32.totalorder %s21, 2
      %p112 = por %p110, %p111
      %p114 = scmp.ne.s32.totalorder %s97, %s113
      %p115 = scmp.eq.s32.totalorder %s21, 0
      %p116 = por %p114, %p115
      %p117 = scmp.le.s32.totalorder 1, %s15
      %p118 = scmp.lt.s32.totalorder %s15, 4
      %p119 = pnand %p117, %p118
      %p120 = pneg %p119
      // Predicated region
      $region9: #{tpu_custom_call.1} parent=5 // pred_check
        _
      $region10: #{tpu_custom_call.1} parent=5 // pred_check_branch
        %122 = sbr.rel (%p119) target = $region12
      $region11: #{tpu_custom_call.1} parent=5 // pred_region
        %s123 = ssub.s32 %s15, 1
        // Predicated region
        $region13: #{tpu_custom_call.1} parent=11 // pred_check
          %p124 = pneg %p62
        $region14: #{tpu_custom_call.1} parent=11 // pred_check_branch
          %126 = sbr.rel (%p124) target = $region16
        $region15: #{tpu_custom_call.1} parent=11 // pred_region
          _
        $region16: #{tpu_custom_call.1} parent=11 // pred_fallthru
          _
        // Predicated region
        $region17: #{tpu_custom_call.1} parent=11 // pred_check
          %p127 = pneg %p83
        $region18: #{tpu_custom_call.1} parent=11 // pred_check_branch
          %129 = sbr.rel (%p127) target = $region20
        $region19: #{tpu_custom_call.1} parent=11 // pred_region
          _
        $region20: #{tpu_custom_call.1} parent=11 // pred_fallthru
          _
      $region12: #{tpu_custom_call.1} parent=5 // pred_fallthru
        _
      %p130 = scmp.lt.s32.totalorder %s15, 3
      // Predicated region
      $region21: #{tpu_custom_call.1} parent=5 // pred_check
        %p131 = pneg %p130
      $region22: #{tpu_custom_call.1} parent=5 // pred_check_branch
        %133 = sbr.rel (%p131) target = $region24
      $region23: #{tpu_custom_call.1} parent=5 // pred_region
        // Predicated region
        $region25: #{tpu_custom_call.1} parent=23 // pred_check
          %p134 = pneg %p35
        $region26: #{tpu_custom_call.1} parent=23 // pred_check_branch
          %136 = sbr.rel (%p134) target = $region28
        $region27: #{tpu_custom_call.1} parent=23 // pred_region
          %s137 = sand.u32 %s25, 1
          %s138 = scalar_lea.sflag [#allocation3], %s137
          %s139 = sand.u32 %s25, 1
          %s140 = smul.addr %s139, 32
          %s141 = scalar_lea.vmem [#allocation2], %s140
          %s142 = smul.u32 8, %s15
          %s143 = ssub.s32 18, %s142
          %p144 = scmp.lt.s32.totalorder %s143, 8
          %s145 = scalar_select %p144, %s143, 8
          %s146 = smul.u32 64, %s145
          %s148 = ssub.s32 512, %s146
          %149 = vsyncadd %s138, %s148
          %p150 = scmp.ne.s32.totalorder 0, %s146
          %s151 = smul.addr %s142, 64
          %s152 = scalar_lea.hbm %s0, %s151
          %s153 = smul.u32 4, %s145
          %s154 = sshll.u32 %s141, 4
          %s155 = int_to_ptr.vmem [resolvable:$true] %s154
          %s156 = sshll.u32 %s153, 4
          %160 = dma.hbm_to_vmem [thread:$0]  (%p150), %s152, %s156, %s155, %s138, 64, 64, 4
        $region28: #{tpu_custom_call.1} parent=23 // pred_fallthru
          _
      $region24: #{tpu_custom_call.1} parent=5 // pred_fallthru
        _
      %p161 = scmp.le.s32.totalorder 1, %s15
      %p162 = scmp.lt.s32.totalorder %s15, 4
      %p163 = pnand %p161, %p162
      %p164 = pneg %p163
      // Predicated region
      $region29: #{tpu_custom_call.1} parent=5 // pred_check
        _
      $region30: #{tpu_custom_call.1} parent=5 // pred_check_branch
        %166 = sbr.rel (%p163) target = $region32
      $region31: #{tpu_custom_call.1} parent=5 // pred_region
        %s167 = ssub.s32 %s15, 1
        %s168 = sand.u32 %s28, 1
        %s169 = scalar_lea.sflag [#allocation3], %s168
        %s170 = sand.u32 %s28, 1
        %s171 = smul.addr %s170, 32
        %s172 = scalar_lea.vmem [#allocation2], %s171
        // Predicated region
        $region33: #{tpu_custom_call.1} parent=31 // pred_check
          %p173 = pneg %p41
        $region34: #{tpu_custom_call.1} parent=31 // pred_check_branch
          %175 = sbr.rel (%p173) target = $region36
        $region35: #{tpu_custom_call.1} parent=31 // pred_region
          %176 = dma.done %s169, 512
        $region36: #{tpu_custom_call.1} parent=31 // pred_fallthru
          _
        %s177 = sand.u32 %s28, 1
        %s178 = scalar_lea.sflag [#allocation3], %s177
        %s179 = sand.u32 %s28, 1
        %s180 = smul.addr %s179, 32
        %s181 = scalar_lea.vmem [#allocation2], %s180
        %p182 = pneg %p41
        %p183 = pneg %p38
        %p184 = pneg %p62
        %p185 = pneg %p59
        %p186 = pneg %p83
        %p187 = pneg %p80
        %p188 = pneg %p109
        %p189 = pneg %p106
        %s190 = sand.u32 %s96, 1
        %s191 = scalar_lea.sflag [#allocation4], %s190
        %s192 = sand.u32 %s96, 1
        %s193 = smul.addr %s192, 64
        %s194 = scalar_lea.vmem [#allocation5], %s193
        %s195 = smul.u32 8, %s20
        %s196 = ssub.s32 18, %s195
        %p197 = scmp.lt.s32.totalorder %s196, 8
        %s198 = scalar_select %p197, %s196, 8
        %s199 = smul.u32 64, %s198
        %s200 = smul.u32 8, %s20
        %s201 = ssub.s32 18, %s200
        %p202 = scmp.lt.s32.totalorder %s201, 8
        %s203 = scalar_select %p202, %s201, 8
        %s204 = smul.u32 128, %s203
        %v206 = vld [vmem:[%s172] sm:$0xf]
        %v207 = vld [vmem:[%s172 + $0x4] sm:$0xf]
        %v208 = vld [vmem:[%s172 + $0x8] sm:$0xf]
        %v209 = vld [vmem:[%s172 + $0xc] sm:$0xf]
        %v210 = vld [vmem:[%s172 + $0x10] sm:$0xf]
        %v211 = vld [vmem:[%s172 + $0x14] sm:$0xf]
        %v212 = vld [vmem:[%s172 + $0x18] sm:$0xf]
        %v213 = vld [vmem:[%s172 + $0x1c] sm:$0xf]
        %v214 = vld [vmem:[%s1] sm:$0xf]
        %v215 = vld [vmem:[%s1 + $0x4] sm:$0xf]
        %v216 = vld [vmem:[%s1 + $0x8] sm:$0xf]
        %v217 = vld [vmem:[%s1 + $0xc] sm:$0xf]
        %v218 = vld [vmem:[%s1 + $0x10] sm:$0xf]
        %v219 = vld [vmem:[%s1 + $0x14] sm:$0xf]
        %v220 = vld [vmem:[%s1 + $0x18] sm:$0xf]
        %v221 = vld [vmem:[%s1 + $0x1c] sm:$0xf]
        %v222 = vld [vmem:[%s1 + $0x20] sm:$0xf]
        %v223 = vld [vmem:[%s1 + $0x24] sm:$0xf]
        %v224 = vld [vmem:[%s1 + $0x28] sm:$0xf]
        %v225 = vld [vmem:[%s1 + $0x2c] sm:$0xf]
        %v226 = vld [vmem:[%s1 + $0x30] sm:$0xf]
        %v227 = vld [vmem:[%s1 + $0x34] sm:$0xf]
        %v228 = vld [vmem:[%s1 + $0x38] sm:$0xf]
        %v229 = vld [vmem:[%s1 + $0x3c] sm:$0xf]
        %v238 = vunpack.c.l.b16 %v206
        %v239 = vunpack.c.l.b16 %v207
        %v240 = vunpack.c.l.b16 %v208
        %v241 = vunpack.c.l.b16 %v209
        %v242 = vunpack.c.l.b16 %v210
        %v243 = vunpack.c.l.b16 %v211
        %v244 = vunpack.c.l.b16 %v212
        %v245 = vunpack.c.l.b16 %v213
        %v246 = vpack.c.b16 %v239, %v238
        %v247 = vpack.c.b16 %v241, %v240
        %v248 = vpack.c.b16 %v243, %v242
        %v249 = vpack.c.b16 %v245, %v244
        %v270 = vunpack.c.l.b16 %v214
        %v271 = vunpack.c.l.b16 %v215
        %v272 = vunpack.c.l.b16 %v216
        %v273 = vunpack.c.l.b16 %v217
        %v274 = vunpack.c.l.b16 %v218
        %v275 = vunpack.c.l.b16 %v219
        %v276 = vunpack.c.l.b16 %v220
        %v277 = vunpack.c.l.b16 %v221
        %v278 = vunpack.c.l.b16 %v222
        %v279 = vunpack.c.l.b16 %v223
        %v280 = vunpack.c.l.b16 %v224
        %v281 = vunpack.c.l.b16 %v225
        %v282 = vunpack.c.l.b16 %v226
        %v283 = vunpack.c.l.b16 %v227
        %v284 = vunpack.c.l.b16 %v228
        %v285 = vunpack.c.l.b16 %v229
        %v286 = vpack.c.b16 %v271, %v270
        %v287 = vpack.c.b16 %v273, %v272
        %v288 = vpack.c.b16 %v275, %v274
        %v289 = vpack.c.b16 %v277, %v276
        %v290 = vpack.c.b16 %v279, %v278
        %v291 = vpack.c.b16 %v281, %v280
        %v292 = vpack.c.b16 %v283, %v282
        %v293 = vpack.c.b16 %v285, %v284
        %302 = vmatprep.subr.bf16.mxu0 0
        %303 = vmatpush1.bf16.msra.mxu0 %v293
        %304 = vmatprep.subr.bf16.mxu0 0
        %305 = vmatpush1.bf16.msra.mxu0 %v292
        %306 = vmatprep.subr.bf16.mxu0 0
        %307 = vmatpush1.bf16.msra.mxu0 %v291
        %308 = vmatprep.subr.bf16.mxu0 0
        %309 = vmatpush1.bf16.msra.mxu0 %v290
        %310 = vmatprep.subr.bf16.mxu0 0
        %311 = vmatpush1.bf16.msra.mxu0 %v289
        %312 = vmatprep.subr.bf16.mxu0 0
        %313 = vmatpush1.bf16.msra.mxu0 %v288
        %314 = vmatprep.subr.bf16.mxu0 0
        %315 = vmatpush1.bf16.msra.mxu0 %v287
        %316 = vmatprep.subr.bf16.mxu0 0
        %317 = vmatpush1.bf16.msra.mxu0 %v286
        %318 = vmatprep.subr.bf16.mxu0 0
        %319 = vmatpush2.bf16.msra.mxu0 0
        %320 = vmatprep.subr.bf16.mxu0 0
        %321 = vmatpush2.bf16.msra.mxu0 0
        %322 = vmatprep.subr.bf16.mxu0 0
        %323 = vmatpush2.bf16.msra.mxu0 0
        %324 = vmatprep.subr.bf16.mxu0 0
        %325 = vmatpush2.bf16.msra.mxu0 0
        %326 = vmatprep.subr.bf16.mxu0 0
        %327 = vmatpush2.bf16.msra.mxu0 0
        %328 = vmatprep.subr.bf16.mxu0 0
        %329 = vmatpush2.bf16.msra.mxu0 0
        %330 = vmatprep.subr.bf16.mxu0 0
        %331 = vmatpush2.bf16.msra.mxu0 0
        %332 = vmatprep.subr.bf16.mxu0 0
        %333 = vmatpush2.bf16.msra.mxu0 0
        %334 = vmatprep.mubr.bf16.mxu0 0
        %335 = vmatmul.mubr.bf16.gmra.mxu0 %v246
        %v336 = vpop.f32.mrf.mxu0
        %v337 = vadd.f32 0.0, %v336
        %v338 = vpop.f32.mrf.mxu0
        %v339 = vpop.f32.mrf.mxu0
        %v340 = vadd.f32 0.0, %v339
        %v341 = vpop.f32.mrf.mxu0
        %342 = vmatprep.mubr.bf16.mxu0 0
        %343 = vmatmul.mubr.bf16.gmra.mxu0 %v247
        %v344 = vpop.f32.mrf.mxu0
        %v345 = vadd.f32 0.0, %v344
        %v346 = vpop.f32.mrf.mxu0
        %v347 = vpop.f32.mrf.mxu0
        %v348 = vadd.f32 0.0, %v347
        %v349 = vpop.f32.mrf.mxu0
        %350 = vmatprep.mubr.bf16.mxu0 0
        %351 = vmatmul.mubr.bf16.gmra.mxu0 %v248
        %v352 = vpop.f32.mrf.mxu0
        %v353 = vadd.f32 0.0, %v352
        %v354 = vpop.f32.mrf.mxu0
        %v355 = vpop.f32.mrf.mxu0
        %v356 = vadd.f32 0.0, %v355
        %v357 = vpop.f32.mrf.mxu0
        %358 = vmatprep.mubr.bf16.mxu0 0
        %359 = vmatmul.mubr.bf16.gmra.mxu0 %v249
        %v360 = vpop.f32.mrf.mxu0
        %v361 = vadd.f32 0.0, %v360
        %v362 = vpop.f32.mrf.mxu0
        %v363 = vpop.f32.mrf.mxu0
        %v364 = vadd.f32 0.0, %v363
        %v365 = vpop.f32.mrf.mxu0
        %366 = vdwg.mxu0
        %v367 = vpack.c.bf16 %v340, %v337
        %v368 = vpack.c.bf16 %v348, %v345
        %v369 = vpack.c.bf16 %v356, %v353
        %v370 = vpack.c.bf16 %v364, %v361
        %v371 = vld [vmem:[%s2] sm:$0x3]
        %vm372 = vcmask 31744
        %v374 = vsel %vm372, %v367, 0
        %v377 = vsel %vm372, %v368, 0
        %v380 = vsel %vm372, %v369, 0
        %v383 = vsel %vm372, %v370, 0
        %vm385 = vcmask 1041408
        %v387 = vsel %vm385, %v371, 0
        %389 = vmatprep.subr.bf16.mxu0 0
        %390 = vmatpush1.bf16.msra.mxu0 0
        %391 = vmatprep.subr.bf16.mxu0 0
        %392 = vmatpush1.bf16.msra.mxu0 0
        %393 = vmatprep.subr.bf16.mxu0 0
        %394 = vmatpush1.bf16.msra.mxu0 0
        %395 = vmatprep.subr.bf16.mxu0 0
        %396 = vmatpush1.bf16.msra.mxu0 0
        %397 = vmatprep.subr.bf16.mxu0 0
        %398 = vmatpush1.bf16.msra.mxu0 0
        %399 = vmatprep.subr.bf16.mxu0 0
        %400 = vmatpush1.bf16.msra.mxu0 0
        %401 = vmatprep.subr.bf16.mxu0 0
        %402 = vmatpush1.bf16.msra.mxu0 0
        %403 = vmatprep.subr.bf16.mxu0 0
        %404 = vmatpush1.bf16.msra.mxu0 %v387
        %405 = vmatprep.subr.bf16.mxu0 0
        %406 = vmatpush2.bf16.msra.mxu0 0
        %407 = vmatprep.subr.bf16.mxu0 0
        %408 = vmatpush2.bf16.msra.mxu0 0
        %409 = vmatprep.subr.bf16.mxu0 0
        %410 = vmatpush2.bf16.msra.mxu0 0
        %411 = vmatprep.subr.bf16.mxu0 0
        %412 = vmatpush2.bf16.msra.mxu0 0
        %413 = vmatprep.subr.bf16.mxu0 0
        %414 = vmatpush2.bf16.msra.mxu0 0
        %415 = vmatprep.subr.bf16.mxu0 0
        %416 = vmatpush2.bf16.msra.mxu0 0
        %417 = vmatprep.subr.bf16.mxu0 0
        %418 = vmatpush2.bf16.msra.mxu0 0
        %419 = vmatprep.subr.bf16.mxu0 0
        %420 = vmatpush2.bf16.msra.mxu0 0
        %421 = vmatprep.mubr.bf16.mxu0 0
        %422 = vmatmul.mubr.bf16.gmra.mxu0 %v374
        %v423 = vpop.f32.mrf.mxu0
        %v424 = vadd.f32 0.0, %v423
        %v425 = vpop.f32.mrf.mxu0
        %v426 = vpop.f32.mrf.mxu0
        %v427 = vadd.f32 0.0, %v426
        %v428 = vpop.f32.mrf.mxu0
        %429 = vmatprep.mubr.bf16.mxu0 0
        %430 = vmatmul.mubr.bf16.gmra.mxu0 %v377
        %v431 = vpop.f32.mrf.mxu0
        %v432 = vadd.f32 0.0, %v431
        %v433 = vpop.f32.mrf.mxu0
        %v434 = vpop.f32.mrf.mxu0
        %v435 = vadd.f32 0.0, %v434
        %v436 = vpop.f32.mrf.mxu0
        %437 = vmatprep.mubr.bf16.mxu0 0
        %438 = vmatmul.mubr.bf16.gmra.mxu0 %v380
        %v439 = vpop.f32.mrf.mxu0
        %v440 = vadd.f32 0.0, %v439
        %v441 = vpop.f32.mrf.mxu0
        %v442 = vpop.f32.mrf.mxu0
        %v443 = vadd.f32 0.0, %v442
        %v444 = vpop.f32.mrf.mxu0
        %445 = vmatprep.mubr.bf16.mxu0 0
        %446 = vmatmul.mubr.bf16.gmra.mxu0 %v383
        %v447 = vpop.f32.mrf.mxu0
        %v448 = vadd.f32 0.0, %v447
        %v449 = vpop.f32.mrf.mxu0
        %v450 = vpop.f32.mrf.mxu0
        %v451 = vadd.f32 0.0, %v450
        %v452 = vpop.f32.mrf.mxu0
        %453 = vdwg.mxu0
        %454 = vst [vmem:[%s194] sm:$0xff] %v424
        %455 = vst [vmem:[%s194 + $0x8] sm:$0xff] %v427
        %456 = vst [vmem:[%s194 + $0x10] sm:$0xff] %v432
        %457 = vst [vmem:[%s194 + $0x18] sm:$0xff] %v435
        %458 = vst [vmem:[%s194 + $0x20] sm:$0xff] %v440
        %459 = vst [vmem:[%s194 + $0x28] sm:$0xff] %v443
        %460 = vst [vmem:[%s194 + $0x30] sm:$0xff] %v448
        %461 = vst [vmem:[%s194 + $0x38] sm:$0xff] %v451
        %s462 = sand.u32 %s96, 1
        %s463 = scalar_lea.sflag [#allocation4], %s462
        %s464 = sand.u32 %s96, 1
        %s465 = smul.addr %s464, 64
        %s466 = scalar_lea.vmem [#allocation5], %s465
        // Predicated region
        $region37: #{tpu_custom_call.1} parent=31 // pred_check
          %p467 = pneg %p106
        $region38: #{tpu_custom_call.1} parent=31 // pred_check_branch
          %469 = sbr.rel (%p467) target = $region40
        $region39: #{tpu_custom_call.1} parent=31 // pred_region
          %s470 = smul.u32 8, %s20
          %s471 = ssub.s32 18, %s470
          %p472 = scmp.lt.s32.totalorder %s471, 8
          %s473 = scalar_select %p472, %s471, 8
          %s474 = smul.u32 128, %s473
          %s476 = ssub.s32 1024, %s474
          %477 = vsyncadd %s463, %s476
          %p478 = scmp.ne.s32.totalorder 0, %s474
          %s479 = smul.addr %s470, 128
          %s480 = scalar_lea.hbm %s3, %s479
          %s481 = smul.u32 8, %s473
          %s482 = sshll.u32 %s466, 4
          %s483 = int_to_ptr.vmem [resolvable:$true] %s482
          %s484 = sshll.u32 %s481, 4
          %488 = dma.vmem_to_hbm [thread:$0]  (%p478), %s483, %s484, %s480, %s463, 128, 128, 8
        $region40: #{tpu_custom_call.1} parent=31 // pred_fallthru
          _
      $region32: #{tpu_custom_call.1} parent=5 // pred_fallthru
        _
      %p489 = scmp.le.s32.totalorder 2, %s15
      // Predicated region
      $region41: #{tpu_custom_call.1} parent=5 // pred_check
        %p490 = pneg %p489
      $region42: #{tpu_custom_call.1} parent=5 // pred_check_branch
        %492 = sbr.rel (%p490) target = $region44
      $region43: #{tpu_custom_call.1} parent=5 // pred_region
        %s493 = ssub.s32 %s15, 2
        // Predicated region
        $region45: #{tpu_custom_call.1} parent=43 // pred_check
          %p494 = pneg %p112
        $region46: #{tpu_custom_call.1} parent=43 // pred_check_branch
          %496 = sbr.rel (%p494) target = $region48
        $region47: #{tpu_custom_call.1} parent=43 // pred_region
          %s497 = sand.u32 %s97, 1
          %s498 = scalar_lea.sflag [#allocation4], %s497
          %s499 = sand.u32 %s97, 1
          %s500 = smul.addr %s499, 64
          %s501 = scalar_lea.vmem [#allocation5], %s500
          %502 = dma.done %s498, 1024
        $region48: #{tpu_custom_call.1} parent=43 // pred_fallthru
          _
      $region44: #{tpu_custom_call.1} parent=5 // pred_fallthru
        _
    $region6: #{tpu_custom_call.1} parent=1 // loop_footer
      %s19 = sadd.s32 1, %s15
    $region7: #{tpu_custom_call.1} parent=1 // loop_footer_branch
      %14 = sbr.rel target = $region3
    $region8: #{tpu_custom_call.1} parent=1 // loop_exit
      _
    %503 = vsyncpa [#allocation3], 1
    %s504 = scalar_lea.sflag [#allocation3], 1
    %505 = vsyncpa %s504, 1
    %506 = vsyncpa [#allocation4], 1
    %s507 = scalar_lea.sflag [#allocation4], 1
    %508 = vsyncpa %s507, 1

// kernel: tpu_custom_call.1
$region0: #{tpu_custom_call.1}
  #allocation0 [shape = 'u32[]', space=smem, size = 0x4, offset = 0x4, fixed_abs, tag = 'smem constant byte address 0x4 - core index']
  #allocation1 [shape = 'u32[144,128]{1,0:T(1,128)}', space=vmem, size = 0x12000, scoped, tag = 'internal scratch']
  %s0 = inlined_call_operand.hbm [shape: bf16[144,128], index: 0, kind: input, shape index: {}]
  %s1 = inlined_call_operand.vmem [shape: bf16[128,4], index: 1, kind: input, shape index: {}]
  %s2 = inlined_call_operand.vmem [shape: bf16[4,128], index: 2, kind: input, shape index: {}]
  %s3 = inlined_call_operand.hbm [shape: f32[144,128], index: 3, kind: output, shape index: {}]
  %s4 = sld [smem:[#allocation0]]
  $region49: #{tpu_custom_call.1} parent=0
    _
  %s6 = ssub.s32 1, %s4
  %s7 = scalar_select 0, %s6, %s4
  $region1: #{tpu_custom_call.1} parent=0
    #allocation2 [shape = 'u8[32768]{0}', space=vmem, size = 0x8000, scoped, tag = 'input window, operand 0']
    #allocation3 [shape = 's32[2]{0}', space=sflag, size = 0x8, scoped, tag = 'scoped memory for tpu_custom_call.1']
    #allocation4 [shape = 's32[2]{0}', space=sflag, size = 0x8, scoped, tag = 'scoped memory for tpu_custom_call.1']
    #allocation5 [shape = 'u8[65536]{0}', space=vmem, size = 0x10000, scoped, tag = 'output window, operand 0']
    %8 = vsyncpa [#allocation3], 0
    %s9 = scalar_lea.sflag [#allocation3], 1
    %10 = vsyncpa %s9, 0
    %11 = vsyncpa [#allocation4], 0
    %s12 = scalar_lea.sflag [#allocation4], 1
    %13 = vsyncpa %s12, 0
    loop: start=0, step=1, limit=5
    $region2: #{tpu_custom_call.1} parent=1 // loop_pre_header
      _
    $region3: #{tpu_custom_call.1} parent=1 // loop_header
      %s15 = sphi 0, %s19
      %p16 = scmp.ge.s32.totalorder %s15, 5
      %s25 = sphi 0, %s27
      %s28 = sphi 0, %s25
      %s29 = sphi 0, %s28
      %s45 = sphi 0, %s29
      %s49 = sphi 0, %s49
      %s51 = sphi 0, %s49
      %s52 = sphi 0, %s51
      %s66 = sphi 0, %s52
      %s70 = sphi 0, %s70
      %s72 = sphi 0, %s70
      %s73 = sphi 0, %s72
      %s87 = sphi 0, %s73
      %s93 = sphi 0, %s95
      %s96 = sphi 0, %s93
      %s97 = sphi 0, %s96
      %s113 = sphi 0, %s97
    $region4: #{tpu_custom_call.1} parent=1 // loop_header_branch
      %18 = sbr.rel (%p16) target = $region8
    $region5: #{tpu_custom_call.1} parent=1 // loop_body
      %s20 = ssub.s32 %s15, 1
      %s21 = ssub.s32 %s15, 2
      %s22 = sadd.s32 %s15, 1
      %s23 = ssub.s32 %s15, %s22
      %p24 = scmp.eq.s32.totalorder %s23, 0
      %s26 = sadd.s32 %s25, 1
      %s27 = scalar_select %p24, %s25, %s26
      %p30 = pneg %p24
      %p31 = scmp.eq.s32.totalorder %s15, 2
      %p32 = por %p30, %p31
      %p33 = scmp.ne.s32.totalorder %s25, %s28
      %p34 = scmp.eq.s32.totalorder %s15, 0
      %p35 = por %p33, %p34
      %p36 = scmp.ne.s32.totalorder %s25, %s28
      %p37 = scmp.eq.s32.totalorder %s20, 2
      %p38 = por %p36, %p37
      %p39 = scmp.ne.s32.totalorder %s28, %s29
      %p40 = scmp.eq.s32.totalorder %s20, 0
      %p41 = por %p39, %p40
      %p42 = scmp.ne.s32.totalorder %s28, %s29
      %p43 = scmp.eq.s32.totalorder %s21, 2
      %p44 = por %p42, %p43
      %p46 = scmp.ne.s32.totalorder %s29, %s45
      %p47 = scmp.eq.s32.totalorder %s21, 0
      %p48 = por %p46, %p47
      %s50 = sadd.s32 %s49, 1
      %p53 = scmp.eq.s32.totalorder %s15, 2
      %p54 = scmp.ne.s32.totalorder %s49, %s51
      %p55 = scmp.eq.s32.totalorder %s15, 0
      %p56 = por %p54, %p55
      %p57 = scmp.ne.s32.totalorder %s49, %s51
      %p58 = scmp.eq.s32.totalorder %s20, 2
      %p59 = por %p57, %p58
      %p60 = scmp.ne.s32.totalorder %s51, %s52
      %p61 = scmp.eq.s32.totalorder %s20, 0
      %p62 = por %p60, %p61
      %p63 = scmp.ne.s32.totalorder %s51, %s52
      %p64 = scmp.eq.s32.totalorder %s21, 2
      %p65 = por %p63, %p64
      %p67 = scmp.ne.s32.totalorder %s52, %s66
      %p68 = scmp.eq.s32.totalorder %s21, 0
      %p69 = por %p67, %p68
      %s71 = sadd.s32 %s70, 1
      %p74 = scmp.eq.s32.totalorder %s15, 2
      %p75 = scmp.ne.s32.totalorder %s70, %s72
      %p76 = scmp.eq.s32.totalorder %s15, 0
      %p77 = por %p75, %p76
      %p78 = scmp.ne.s32.totalorder %s70, %s72
      %p79 = scmp.eq.s32.totalorder %s20, 2
      %p80 = por %p78, %p79
      %p81 = scmp.ne.s32.totalorder %s72, %s73
      %p82 = scmp.eq.s32.totalorder %s20, 0
      %p83 = por %p81, %p82
      %p84 = scmp.ne.s32.totalorder %s72, %s73
      %p85 = scmp.eq.s32.totalorder %s21, 2
      %p86 = por %p84, %p85
      %p88 = scmp.ne.s32.totalorder %s73, %s87
      %p89 = scmp.eq.s32.totalorder %s21, 0
      %p90 = por %p88, %p89
      %s91 = ssub.s32 %s15, %s22
      %p92 = scmp.eq.s32.totalorder %s91, 0
      %s94 = sadd.s32 %s93, 1
      %s95 = scalar_select %p92, %s93, %s94
      %p98 = pneg %p92
      %p99 = scmp.eq.s32.totalorder %s15, 2
      %p100 = por %p98, %p99
      %p101 = scmp.ne.s32.totalorder %s93, %s96
      %p102 = scmp.eq.s32.totalorder %s15, 0
      %p103 = por %p101, %p102
      %p104 = scmp.ne.s32.totalorder %s93, %s96
      %p105 = scmp.eq.s32.totalorder %s20, 2
      %p106 = por %p104, %p105
      %p107 = scmp.ne.s32.totalorder %s96, %s97
      %p108 = scmp.eq.s32.totalorder %s20, 0
      %p109 = por %p107, %p108
      %p110 = scmp.ne.s32.totalorder %s96, %s97
      %p111 = scmp.eq.s32.totalorder %s21, 2
      %p112 = por %p110, %p111
      %p114 = scmp.ne.s32.totalorder %s97, %s113
      %p115 = scmp.eq.s32.totalorder %s21, 0
      %p116 = por %p114, %p115
      %p117 = scmp.le.s32.totalorder 1, %s15
      %p118 = scmp.lt.s32.totalorder %s15, 4
      %p119 = pnand %p117, %p118
      %p120 = pneg %p119
      // Predicated region
      $region9: #{tpu_custom_call.1} parent=5 // pred_check
        _
      $region10: #{tpu_custom_call.1} parent=5 // pred_check_branch
        %122 = sbr.rel (%p119) target = $region12
      $region11: #{tpu_custom_call.1} parent=5 // pred_region
        %s123 = ssub.s32 %s15, 1
        // Predicated region
        $region13: #{tpu_custom_call.1} parent=11 // pred_check
          %p124 = pneg %p62
        $region14: #{tpu_custom_call.1} parent=11 // pred_check_branch
          %126 = sbr.rel (%p124) target = $region16
        $region15: #{tpu_custom_call.1} parent=11 // pred_region
          _
        $region16: #{tpu_custom_call.1} parent=11 // pred_fallthru
          _
        // Predicated region
        $region17: #{tpu_custom_call.1} parent=11 // pred_check
          %p127 = pneg %p83
        $region18: #{tpu_custom_call.1} parent=11 // pred_check_branch
          %129 = sbr.rel (%p127) target = $region20
        $region19: #{tpu_custom_call.1} parent=11 // pred_region
          _
        $region20: #{tpu_custom_call.1} parent=11 // pred_fallthru
          _
      $region12: #{tpu_custom_call.1} parent=5 // pred_fallthru
        _
      %p130 = scmp.lt.s32.totalorder %s15, 3
      // Predicated region
      $region21: #{tpu_custom_call.1} parent=5 // pred_check
        %p131 = pneg %p130
      $region22: #{tpu_custom_call.1} parent=5 // pred_check_branch
        %133 = sbr.rel (%p131) target = $region24
      $region23: #{tpu_custom_call.1} parent=5 // pred_region
        // Predicated region
        $region25: #{tpu_custom_call.1} parent=23 // pred_check
          %p134 = pneg %p35
        $region26: #{tpu_custom_call.1} parent=23 // pred_check_branch
          %136 = sbr.rel (%p134) target = $region28
        $region27: #{tpu_custom_call.1} parent=23 // pred_region
          %s137 = sand.u32 %s25, 1
          %s138 = scalar_lea.sflag [#allocation3], %s137
          %s139 = sand.u32 %s25, 1
          %s140 = smul.addr %s139, 32
          %s141 = scalar_lea.vmem [#allocation2], %s140
          %s142 = smul.u32 8, %s15
          %s143 = ssub.s32 18, %s142
          %p144 = scmp.lt.s32.totalorder %s143, 8
          %s145 = scalar_select %p144, %s143, 8
          %s146 = smul.u32 64, %s145
          %s148 = ssub.s32 512, %s146
          %149 = vsyncadd %s138, %s148
          %p150 = scmp.ne.s32.totalorder 0, %s146
          %s151 = smul.addr %s142, 64
          %s152 = scalar_lea.hbm %s0, %s151
          %s153 = smul.u32 4, %s145
          %s154 = sshll.u32 %s141, 4
          %s155 = int_to_ptr.vmem [resolvable:$true] %s154
          %s156 = sshll.u32 %s153, 4
          %160 = dma.hbm_to_vmem [thread:$0]  (%p150), %s152, %s156, %s155, %s138, 64, 64, 4
        $region28: #{tpu_custom_call.1} parent=23 // pred_fallthru
          _
      $region24: #{tpu_custom_call.1} parent=5 // pred_fallthru
        _
      %p161 = scmp.le.s32.totalorder 1, %s15
      %p162 = scmp.lt.s32.totalorder %s15, 4
      %p163 = pnand %p161, %p162
      %p164 = pneg %p163
      // Predicated region
      $region29: #{tpu_custom_call.1} parent=5 // pred_check
        _
      $region30: #{tpu_custom_call.1} parent=5 // pred_check_branch
        %166 = sbr.rel (%p163) target = $region32
      $region31: #{tpu_custom_call.1} parent=5 // pred_region
        %s167 = ssub.s32 %s15, 1
        %s168 = sand.u32 %s28, 1
        %s169 = scalar_lea.sflag [#allocation3], %s168
        %s170 = sand.u32 %s28, 1
        %s171 = smul.addr %s170, 32
        %s172 = scalar_lea.vmem [#allocation2], %s171
        // Predicated region
        $region33: #{tpu_custom_call.1} parent=31 // pred_check
          %p173 = pneg %p41
        $region34: #{tpu_custom_call.1} parent=31 // pred_check_branch
          %175 = sbr.rel (%p173) target = $region36
        $region35: #{tpu_custom_call.1} parent=31 // pred_region
          %176 = dma.done %s169, 512
        $region36: #{tpu_custom_call.1} parent=31 // pred_fallthru
          _
        %s177 = sand.u32 %s28, 1
        %s178 = scalar_lea.sflag [#allocation3], %s177
        %s179 = sand.u32 %s28, 1
        %s180 = smul.addr %s179, 32
        %s181 = scalar_lea.vmem [#allocation2], %s180
        %p182 = pneg %p41
        %p183 = pneg %p38
        %p184 = pneg %p62
        %p185 = pneg %p59
        %p186 = pneg %p83
        %p187 = pneg %p80
        %p188 = pneg %p109
        %p189 = pneg %p106
        %s190 = sand.u32 %s96, 1
        %s191 = scalar_lea.sflag [#allocation4], %s190
        %s192 = sand.u32 %s96, 1
        %s193 = smul.addr %s192, 64
        %s194 = scalar_lea.vmem [#allocation5], %s193
        %s195 = smul.u32 8, %s20
        %s196 = ssub.s32 18, %s195
        %p197 = scmp.lt.s32.totalorder %s196, 8
        %s198 = scalar_select %p197, %s196, 8
        %s199 = smul.u32 64, %s198
        %s200 = smul.u32 8, %s20
        %s201 = ssub.s32 18, %s200
        %p202 = scmp.lt.s32.totalorder %s201, 8
        %s203 = scalar_select %p202, %s201, 8
        %s204 = smul.u32 128, %s203
        %v206 = vld [vmem:[%s172] sm:$0xf]
        %v207 = vld [vmem:[%s172 + $0x4] sm:$0xf]
        %v208 = vld [vmem:[%s172 + $0x8] sm:$0xf]
        %v209 = vld [vmem:[%s172 + $0xc] sm:$0xf]
        %v210 = vld [vmem:[%s172 + $0x10] sm:$0xf]
        %v211 = vld [vmem:[%s172 + $0x14] sm:$0xf]
        %v212 = vld [vmem:[%s172 + $0x18] sm:$0xf]
        %v213 = vld [vmem:[%s172 + $0x1c] sm:$0xf]
        %v214 = vld [vmem:[%s1] sm:$0xf]
        %v215 = vld [vmem:[%s1 + $0x4] sm:$0xf]
        %v216 = vld [vmem:[%s1 + $0x8] sm:$0xf]
        %v217 = vld [vmem:[%s1 + $0xc] sm:$0xf]
        %v218 = vld [vmem:[%s1 + $0x10] sm:$0xf]
        %v219 = vld [vmem:[%s1 + $0x14] sm:$0xf]
        %v220 = vld [vmem:[%s1 + $0x18] sm:$0xf]
        %v221 = vld [vmem:[%s1 + $0x1c] sm:$0xf]
        %v222 = vld [vmem:[%s1 + $0x20] sm:$0xf]
        %v223 = vld [vmem:[%s1 + $0x24] sm:$0xf]
        %v224 = vld [vmem:[%s1 + $0x28] sm:$0xf]
        %v225 = vld [vmem:[%s1 + $0x2c] sm:$0xf]
        %v226 = vld [vmem:[%s1 + $0x30] sm:$0xf]
        %v227 = vld [vmem:[%s1 + $0x34] sm:$0xf]
        %v228 = vld [vmem:[%s1 + $0x38] sm:$0xf]
        %v229 = vld [vmem:[%s1 + $0x3c] sm:$0xf]
        %v238 = vunpack.c.l.b16 %v206
        %v239 = vunpack.c.l.b16 %v207
        %v240 = vunpack.c.l.b16 %v208
        %v241 = vunpack.c.l.b16 %v209
        %v242 = vunpack.c.l.b16 %v210
        %v243 = vunpack.c.l.b16 %v211
        %v244 = vunpack.c.l.b16 %v212
        %v245 = vunpack.c.l.b16 %v213
        %v246 = vpack.c.b16 %v239, %v238
        %v247 = vpack.c.b16 %v241, %v240
        %v248 = vpack.c.b16 %v243, %v242
        %v249 = vpack.c.b16 %v245, %v244
        %v270 = vunpack.c.l.b16 %v214
        %v271 = vunpack.c.l.b16 %v215
        %v272 = vunpack.c.l.b16 %v216
        %v273 = vunpack.c.l.b16 %v217
        %v274 = vunpack.c.l.b16 %v218
        %v275 = vunpack.c.l.b16 %v219
        %v276 = vunpack.c.l.b16 %v220
        %v277 = vunpack.c.l.b16 %v221
        %v278 = vunpack.c.l.b16 %v222
        %v279 = vunpack.c.l.b16 %v223
        %v280 = vunpack.c.l.b16 %v224
        %v281 = vunpack.c.l.b16 %v225
        %v282 = vunpack.c.l.b16 %v226
        %v283 = vunpack.c.l.b16 %v227
        %v284 = vunpack.c.l.b16 %v228
        %v285 = vunpack.c.l.b16 %v229
        %v286 = vpack.c.b16 %v271, %v270
        %v287 = vpack.c.b16 %v273, %v272
        %v288 = vpack.c.b16 %v275, %v274
        %v289 = vpack.c.b16 %v277, %v276
        %v290 = vpack.c.b16 %v279, %v278
        %v291 = vpack.c.b16 %v281, %v280
        %v292 = vpack.c.b16 %v283, %v282
        %v293 = vpack.c.b16 %v285, %v284
        %302 = vmatprep.subr.bf16.mxu0 0
        %303 = vmatpush1.bf16.msra.mxu0 %v293
        %304 = vmatprep.subr.bf16.mxu0 0
        %305 = vmatpush1.bf16.msra.mxu0 %v292
        %306 = vmatprep.subr.bf16.mxu0 0
        %307 = vmatpush1.bf16.msra.mxu0 %v291
        %308 = vmatprep.subr.bf16.mxu0 0
        %309 = vmatpush1.bf16.msra.mxu0 %v290
        %310 = vmatprep.subr.bf16.mxu0 0
        %311 = vmatpush1.bf16.msra.mxu0 %v289
        %312 = vmatprep.subr.bf16.mxu0 0
        %313 = vmatpush1.bf16.msra.mxu0 %v288
        %314 = vmatprep.subr.bf16.mxu0 0
        %315 = vmatpush1.bf16.msra.mxu0 %v287
        %316 = vmatprep.subr.bf16.mxu0 0
        %317 = vmatpush1.bf16.msra.mxu0 %v286
        %318 = vmatprep.subr.bf16.mxu0 0
        %319 = vmatpush2.bf16.msra.mxu0 0
        %320 = vmatprep.subr.bf16.mxu0 0
        %321 = vmatpush2.bf16.msra.mxu0 0
        %322 = vmatprep.subr.bf16.mxu0 0
        %323 = vmatpush2.bf16.msra.mxu0 0
        %324 = vmatprep.subr.bf16.mxu0 0
        %325 = vmatpush2.bf16.msra.mxu0 0
        %326 = vmatprep.subr.bf16.mxu0 0
        %327 = vmatpush2.bf16.msra.mxu0 0
        %328 = vmatprep.subr.bf16.mxu0 0
        %329 = vmatpush2.bf16.msra.mxu0 0
        %330 = vmatprep.subr.bf16.mxu0 0
        %331 = vmatpush2.bf16.msra.mxu0 0
        %332 = vmatprep.subr.bf16.mxu0 0
        %333 = vmatpush2.bf16.msra.mxu0 0
        %334 = vmatprep.mubr.bf16.mxu0 0
        %335 = vmatmul.mubr.bf16.gmra.mxu0 %v246
        %v336 = vpop.f32.mrf.mxu0
        %v337 = vadd.f32 0.0, %v336
        %v338 = vpop.f32.mrf.mxu0
        %v339 = vpop.f32.mrf.mxu0
        %v340 = vadd.f32 0.0, %v339
        %v341 = vpop.f32.mrf.mxu0
        %342 = vmatprep.mubr.bf16.mxu0 0
        %343 = vmatmul.mubr.bf16.gmra.mxu0 %v247
        %v344 = vpop.f32.mrf.mxu0
        %v345 = vadd.f32 0.0, %v344
        %v346 = vpop.f32.mrf.mxu0
        %v347 = vpop.f32.mrf.mxu0
        %v348 = vadd.f32 0.0, %v347
        %v349 = vpop.f32.mrf.mxu0
        %350 = vmatprep.mubr.bf16.mxu0 0
        %351 = vmatmul.mubr.bf16.gmra.mxu0 %v248
        %v352 = vpop.f32.mrf.mxu0
        %v353 = vadd.f32 0.0, %v352
        %v354 = vpop.f32.mrf.mxu0
        %v355 = vpop.f32.mrf.mxu0
        %v356 = vadd.f32 0.0, %v355
        %v357 = vpop.f32.mrf.mxu0
        %358 = vmatprep.mubr.bf16.mxu0 0
        %359 = vmatmul.mubr.bf16.gmra.mxu0 %v249
        %v360 = vpop.f32.mrf.mxu0
        %v361 = vadd.f32 0.0, %v360
        %v362 = vpop.f32.mrf.mxu0
        %v363 = vpop.f32.mrf.mxu0
        %v364 = vadd.f32 0.0, %v363
        %v365 = vpop.f32.mrf.mxu0
        %366 = vdwg.mxu0
        %v367 = vpack.c.bf16 %v340, %v337
        %v368 = vpack.c.bf16 %v348, %v345
        %v369 = vpack.c.bf16 %v356, %v353
        %v370 = vpack.c.bf16 %v364, %v361
        %v371 = vld [vmem:[%s2] sm:$0x3]
        %vm372 = vcmask 31744
        %v374 = vsel %vm372, %v367, 0
        %v377 = vsel %vm372, %v368, 0
        %v380 = vsel %vm372, %v369, 0
        %v383 = vsel %vm372, %v370, 0
        %vm385 = vcmask 1041408
        %v387 = vsel %vm385, %v371, 0
        %389 = vmatprep.subr.bf16.mxu0 0
        %390 = vmatpush1.bf16.msra.mxu0 0
        %391 = vmatprep.subr.bf16.mxu0 0
        %392 = vmatpush1.bf16.msra.mxu0 0
        %393 = vmatprep.subr.bf16.mxu0 0
        %394 = vmatpush1.bf16.msra.mxu0 0
        %395 = vmatprep.subr.bf16.mxu0 0
        %396 = vmatpush1.bf16.msra.mxu0 0
        %397 = vmatprep.subr.bf16.mxu0 0
        %398 = vmatpush1.bf16.msra.mxu0 0
        %399 = vmatprep.subr.bf16.mxu0 0
        %400 = vmatpush1.bf16.msra.mxu0 0
        %401 = vmatprep.subr.bf16.mxu0 0
        %402 = vmatpush1.bf16.msra.mxu0 0
        %403 = vmatprep.subr.bf16.mxu0 0
        %404 = vmatpush1.bf16.msra.mxu0 %v387
        %405 = vmatprep.subr.bf16.mxu0 0
        %406 = vmatpush2.bf16.msra.mxu0 0
        %407 = vmatprep.subr.bf16.mxu0 0
        %408 = vmatpush2.bf16.msra.mxu0 0
        %409 = vmatprep.subr.bf16.mxu0 0
        %410 = vmatpush2.bf16.msra.mxu0 0
        %411 = vmatprep.subr.bf16.mxu0 0
        %412 = vmatpush2.bf16.msra.mxu0 0
        %413 = vmatprep.subr.bf16.mxu0 0
        %414 = vmatpush2.bf16.msra.mxu0 0
        %415 = vmatprep.subr.bf16.mxu0 0
        %416 = vmatpush2.bf16.msra.mxu0 0
        %417 = vmatprep.subr.bf16.mxu0 0
        %418 = vmatpush2.bf16.msra.mxu0 0
        %419 = vmatprep.subr.bf16.mxu0 0
        %420 = vmatpush2.bf16.msra.mxu0 0
        %421 = vmatprep.mubr.bf16.mxu0 0
        %422 = vmatmul.mubr.bf16.gmra.mxu0 %v374
        %v423 = vpop.f32.mrf.mxu0
        %v424 = vadd.f32 0.0, %v423
        %v425 = vpop.f32.mrf.mxu0
        %v426 = vpop.f32.mrf.mxu0
        %v427 = vadd.f32 0.0, %v426
        %v428 = vpop.f32.mrf.mxu0
        %429 = vmatprep.mubr.bf16.mxu0 0
        %430 = vmatmul.mubr.bf16.gmra.mxu0 %v377
        %v431 = vpop.f32.mrf.mxu0
        %v432 = vadd.f32 0.0, %v431
        %v433 = vpop.f32.mrf.mxu0
        %v434 = vpop.f32.mrf.mxu0
        %v435 = vadd.f32 0.0, %v434
        %v436 = vpop.f32.mrf.mxu0
        %437 = vmatprep.mubr.bf16.mxu0 0
        %438 = vmatmul.mubr.bf16.gmra.mxu0 %v380
        %v439 = vpop.f32.mrf.mxu0
        %v440 = vadd.f32 0.0, %v439
        %v441 = vpop.f32.mrf.mxu0
        %v442 = vpop.f32.mrf.mxu0
        %v443 = vadd.f32 0.0, %v442
        %v444 = vpop.f32.mrf.mxu0
        %445 = vmatprep.mubr.bf16.mxu0 0
        %446 = vmatmul.mubr.bf16.gmra.mxu0 %v383
        %v447 = vpop.f32.mrf.mxu0
        %v448 = vadd.f32 0.0, %v447
        %v449 = vpop.f32.mrf.mxu0
        %v450 = vpop.f32.mrf.mxu0
        %v451 = vadd.f32 0.0, %v450
        %v452 = vpop.f32.mrf.mxu0
        %453 = vdwg.mxu0
        %454 = vst [vmem:[%s194] sm:$0xff] %v424
        %455 = vst [vmem:[%s194 + $0x8] sm:$0xff] %v427
        %456 = vst [vmem:[%s194 + $0x10] sm:$0xff] %v432
        %457 = vst [vmem:[%s194 + $0x18] sm:$0xff] %v435
        %458 = vst [vmem:[%s194 + $0x20] sm:$0xff] %v440
        %459 = vst [vmem:[%s194 + $0x28] sm:$0xff] %v443
        %460 = vst [vmem:[%s194 + $0x30] sm:$0xff] %v448
        %461 = vst [vmem:[%s194 + $0x38] sm:$0xff] %v451
        %s462 = sand.u32 %s96, 1
        %s463 = scalar_lea.sflag [#allocation4], %s462
        %s464 = sand.u32 %s96, 1
        %s465 = smul.addr %s464, 64
        %s466 = scalar_lea.vmem [#allocation5], %s465
        // Predicated region
        $region37: #{tpu_custom_call.1} parent=31 // pred_check
          %p467 = pneg %p106
        $region38: #{tpu_custom_call.1} parent=31 // pred_check_branch
          %469 = sbr.rel (%p467) target = $region40
        $region39: #{tpu_custom_call.1} parent=31 // pred_region
          %s470 = smul.u32 8, %s20
          %s471 = ssub.s32 18, %s470
          %p472 = scmp.lt.s32.totalorder %s471, 8
          %s473 = scalar_select %p472, %s471, 8
          %s474 = smul.u32 128, %s473
          %s476 = ssub.s32 1024, %s474
          %477 = vsyncadd %s463, %s476
          %p478 = scmp.ne.s32.totalorder 0, %s474
          %s479 = smul.addr %s470, 128
          %s480 = scalar_lea.hbm %s3, %s479
          %s481 = smul.u32 8, %s473
          %s482 = sshll.u32 %s466, 4
          %s483 = int_to_ptr.vmem [resolvable:$true] %s482
          %s484 = sshll.u32 %s481, 4
          %488 = dma.vmem_to_hbm [thread:$0]  (%p478), %s483, %s484, %s480, %s463, 128, 128, 8
        $region40: #{tpu_custom_call.1} parent=31 // pred_fallthru
          _
      $region32: #{tpu_custom_call.1} parent=5 // pred_fallthru
        _
      %p489 = scmp.le.s32.totalorder 2, %s15
      // Predicated region
      $region41: #{tpu_custom_call.1} parent=5 // pred_check
        %p490 = pneg %p489
      $region42: #{tpu_custom_call.1} parent=5 // pred_check_branch
        %492 = sbr.rel (%p490) target = $region44
      $region43: #{tpu_custom_call.1} parent=5 // pred_region
        %s493 = ssub.s32 %s15, 2
        // Predicated region
        $region45: #{tpu_custom_call.1} parent=43 // pred_check
          %p494 = pneg %p112
        $region46: #{tpu_custom_call.1} parent=43 // pred_check_branch
          %496 = sbr.rel (%p494) target = $region48
        $region47: #{tpu_custom_call.1} parent=43 // pred_region
          %s497 = sand.u32 %s97, 1
          %s498 = scalar_lea.sflag [#allocation4], %s497
          %s499 = sand.u32 %s97, 1
          %s500 = smul.addr %s499, 64
          %s501 = scalar_lea.vmem [#allocation5], %s500
          %502 = dma.done %s498, 1024
        $region48: #{tpu_custom_call.1} parent=43 // pred_fallthru
          _
      $region44: #{tpu_custom_call.1} parent=5 // pred_fallthru
        _
    $region6: #{tpu_custom_call.1} parent=1 // loop_footer
      %s19 = sadd.s32 1, %s15
    $region7: #{tpu_custom_call.1} parent=1 // loop_footer_branch
      %14 = sbr.rel target = $region3
    $region8: #{tpu_custom_call.1} parent=1 // loop_exit
      _
    %503 = vsyncpa [#allocation3], 1
    %s504 = scalar_lea.sflag [#allocation3], 1
    %505 = vsyncpa %s504, 1
    %506 = vsyncpa [#allocation4], 1
    %s507 = scalar_lea.sflag [#allocation4], 1
    %508 = vsyncpa %s507, 1

</llo_original>
